<compile_context>
chip_gen: v5e
topology: v5e:2x2
jax: 0.10.0
libtpu: 0.0.40
codegen_flags: <defaults>
</compile_context>

<pallas_src>
import jax
import jax.numpy as jnp
from jax import lax
from jax.experimental import pallas as pl
from jax.experimental.pallas import tpu as pltpu


def _round_up(n: int, m: int) -> int:
    return ((n + m - 1) // m) * m


def _linear_sigmoid_kernel(x_ref, w_ref, b_ref, o_ref):
    # x_ref: (TB, IN)  w_ref: (OUT, IN)  b_ref: (1, OUT)  o_ref: (TB, OUT)
    x = x_ref[...]
    w = w_ref[...]
    b = b_ref[...]
    # y = x @ w.T with f32 MXU accumulation (contraction on dim 1 of both operands,
    # i.e. the MXU handles the transposed operand natively — no transpose HLO).
    y = lax.dot_general(
        x, w,
        dimension_numbers=(((1,), (1,)), ((), ())),
        preferred_element_type=jnp.float32,
    )
    y = y + b                          # f32 bias add (VPU)
    o_ref[...] = jax.nn.sigmoid(y).astype(o_ref.dtype)   # exp on EUP, f32 epilogue


def simple_nn_forward(x, w, b, *, tb: int = 8192):
    """Forward pass of SimpleNN: sigmoid(x @ w.T + b).

    x: (B, 16) f32, w: (4, 16) f32 (native nn.Linear layout), b: (4,) f32
    returns: (B, 4) f32
    """
    B, in_f = x.shape
    out_f = w.shape[0]

    # Batch tile: large (multiple of 8 sublanes) but clamped so tiny batches
    # don't pad excessively.
    TB = min(int(tb), _round_up(B, 8))
    TB = max(8, _round_up(TB, 8))
    B_pad = _round_up(B, TB)
    if B_pad != B:
        x = jnp.pad(x, ((0, B_pad - B), (0, 0)))

    b2d = b.reshape(1, out_f)          # keep bias 2-D for TPU layout friendliness
    grid = (B_pad // TB,)

    cost = pl.CostEstimate(
        flops=2 * B_pad * in_f * out_f,
        transcendentals=B_pad * out_f,
        bytes_accessed=(B_pad * in_f * 4            # x
                        + out_f * in_f * 4          # w
                        + out_f * 4                 # b
                        + B_pad * out_f * 4),       # out
    )

    out = pl.pallas_call(
        _linear_sigmoid_kernel,
        out_shape=jax.ShapeDtypeStruct((B_pad, out_f), jnp.float32),
        grid_spec=pltpu.PrefetchScalarGridSpec(
            num_scalar_prefetch=0,
            grid=grid,
            in_specs=[
                pl.BlockSpec((TB, in_f), lambda i: (i, 0)),       # x: tiled over batch
                pl.BlockSpec((out_f, in_f), lambda i: (0, 0)),    # w: whole array, resident
                pl.BlockSpec((1, out_f), lambda i: (0, 0)),       # b: whole array, resident
            ],
            out_specs=pl.BlockSpec((TB, out_f), lambda i: (i, 0)),
        ),
        compiler_params=pltpu.CompilerParams(
            dimension_semantics=("parallel",),   # batch tiles are independent -> 2 TCs on v7x
        ),
        cost_estimate=cost,
    )(x, w, b2d)

    return out[:B]


if __name__ == "__main__":
    key = jax.random.PRNGKey(0)
    kx, kw, kb, kx2 = jax.random.split(key, 4)

    B, IN, OUT = 8, 16, 4
    x = jax.random.normal(kx, (B, IN), dtype=jnp.float32)
    # Deterministic init matching nn.Linear shapes: weight (4, 16), bias (4,)
    bound = 1.0 / jnp.sqrt(IN)
    w = jax.random.uniform(kw, (OUT, IN), minval=-bound, maxval=bound, dtype=jnp.float32)
    b = jax.random.uniform(kb, (OUT,), minval=-bound, maxval=bound, dtype=jnp.float32)

    # Small-batch run (single tile).
    out = simple_nn_forward(x, w, b)
    jax.block_until_ready(out)
    ref = jax.nn.sigmoid(x @ w.T + b)
    assert out.shape == (B, OUT)
    assert jnp.allclose(out, ref, atol=1e-5), "mismatch vs reference (small batch)"

    # Larger, non-multiple batch to exercise tiling + padding + multi-step grid.
    B2 = 100
    x2 = jax.random.normal(kx2, (B2, IN), dtype=jnp.float32)
    out2 = simple_nn_forward(x2, w, b, tb=32)   # grid=(4,), padded 100 -> 128
    jax.block_until_ready(out2)
    ref2 = jax.nn.sigmoid(x2 @ w.T + b)
    assert out2.shape == (B2, OUT)
    assert jnp.allclose(out2, ref2, atol=1e-5), "mismatch vs reference (tiled batch)"

    print("KERNEL_OK")
</pallas_src>

<mosaic_0001>
module attributes {stable_mosaic.version = 11 : i64} {
  func.func @_linear_sigmoid_kernel(%arg0: i32, %arg1: memref<8x16xf32, #tpu.memory_space<vmem>>, %arg2: memref<4x16xf32, #tpu.memory_space<vmem>>, %arg3: memref<1x4xf32, #tpu.memory_space<vmem>>, %arg4: memref<8x4xf32, #tpu.memory_space<vmem>>) attributes {dimension_semantics = [#tpu.dimension_semantics<parallel>], iteration_bounds = array<i64: 1>, scalar_prefetch = 0 : i64, scratch_operands = 0 : i64, tpu.core_type = #tpu.core_type<tc>, window_params = [{transform_indices = @transform_0, window_bounds = array<i64: 8, 16>}, {pipeline_mode = #tpu.pipeline_mode<synchronous>, transform_indices = @transform_1, window_bounds = array<i64: 4, 16>}, {pipeline_mode = #tpu.pipeline_mode<synchronous>, transform_indices = @transform_2, window_bounds = array<i64: 1, 4>}, {transform_indices = @transform_3, window_bounds = array<i64: 8, 4>}]} {
    %c0 = arith.constant 0 : index
    %c0_0 = arith.constant 0 : index
    %0 = vector.load %arg1[%c0, %c0_0] : memref<8x16xf32, #tpu.memory_space<vmem>>, vector<8x16xf32>
    %c0_1 = arith.constant 0 : index
    %c0_2 = arith.constant 0 : index
    %1 = vector.load %arg2[%c0_1, %c0_2] : memref<4x16xf32, #tpu.memory_space<vmem>>, vector<4x16xf32>
    %c0_3 = arith.constant 0 : index
    %c0_4 = arith.constant 0 : index
    %2 = vector.load %arg3[%c0_3, %c0_4] : memref<1x4xf32, #tpu.memory_space<vmem>>, vector<1x4xf32>
    %cst = arith.constant dense<0.000000e+00> : vector<8x4xf32>
    %3 = tpu.matmul %0, %1, %cst {dimension_numbers = #tpu.dot_dimension_numbers<[1], [1], [0], [0], [0, 0, 1, 0], [], []>} : vector<8x16xf32>, vector<4x16xf32>, vector<8x4xf32> -> vector<8x4xf32>
    %4 = vector.broadcast %2 : vector<1x4xf32> to vector<8x4xf32>
    %5 = arith.addf %3, %4 : vector<8x4xf32>
    %6 = arith.negf %5 : vector<8x4xf32>
    %7 = math.exp %6 : vector<8x4xf32>
    %cst_5 = arith.constant 1.000000e+00 : f32
    %8 = vector.broadcast %cst_5 : f32 to vector<8x4xf32>
    %9 = arith.addf %8, %7 : vector<8x4xf32>
    %10 = arith.divf %8, %9 : vector<8x4xf32>
    %c0_6 = arith.constant 0 : index
    %c0_7 = arith.constant 0 : index
    %11 = vector.load %arg4[%c0_6, %c0_7] : memref<8x4xf32, #tpu.memory_space<vmem>>, vector<8x4xf32>
    tpu.vector_store %arg4[%c0_6, %c0_7], %10 {strides = array<i32>} : memref<8x4xf32, #tpu.memory_space<vmem>>, vector<8x4xf32>,
    return
  }
  func.func @transform_0(%arg0: i32) -> (i32, i32) {
    %c0_i32 = arith.constant 0 : i32
    %c0_i32_0 = arith.constant 0 : i32
    return %arg0, %c0_i32 : i32, i32
  }
  func.func @transform_1(%arg0: i32) -> (i32, i32) {
    %c0_i32 = arith.constant 0 : i32
    %c0_i32_0 = arith.constant 0 : i32
    %c0_i32_1 = arith.constant 0 : i32
    return %c0_i32, %c0_i32_0 : i32, i32
  }
  func.func @transform_2(%arg0: i32) -> (i32, i32) {
    %c0_i32 = arith.constant 0 : i32
    %c0_i32_0 = arith.constant 0 : i32
    %c0_i32_1 = arith.constant 0 : i32
    return %c0_i32, %c0_i32_0 : i32, i32
  }
  func.func @transform_3(%arg0: i32) -> (i32, i32) {
    %c0_i32 = arith.constant 0 : i32
    %c0_i32_0 = arith.constant 0 : i32
    return %arg0, %c0_i32 : i32, i32
  }
}

</mosaic_0001>

<llo_original>
// kernel: tpu_custom_call.1
$region0: #{tpu_custom_call.1}
  #allocation0 [shape = 'u32[]', space=smem, size = 0x4, offset = 0x4, fixed_abs, tag = 'smem constant byte address 0x4 - core index']
  #allocation1 [shape = 'u32[72,128]{1,0:T(1,128)}', space=vmem, size = 0x9000, scoped, tag = 'internal scratch']
  %s0 = inlined_call_operand.hbm [shape: f32[8,16], index: 0, kind: input, shape index: {}]
  %s1 = inlined_call_operand.hbm [shape: f32[4,16], index: 1, kind: input, shape index: {}]
  %s2 = inlined_call_operand.vmem [shape: f32[1,4], index: 2, kind: input, shape index: {}]
  %s3 = inlined_call_operand.vmem [shape: f32[8,4], index: 3, kind: output, shape index: {}]
  %s4 = sld [smem:[#allocation0]]
  $region30: #{tpu_custom_call.1} parent=0
    _
  %s6 = ssub.s32 1, %s4
  %s7 = scalar_select 0, %s6, %s4
  $region1: #{tpu_custom_call.1} parent=0
    #allocation2 [shape = 'u8[4096]{0}', space=vmem, size = 0x1000, scoped, tag = 'input window, operand 0, single buffered']
    #allocation3 [shape = 's32[1]{0}', space=sflag, size = 0x4, scoped, tag = 'scoped memory for tpu_custom_call.1']
    #allocation4 [shape = 'u8[2048]{0}', space=vmem, size = 0x800, scoped, tag = 'input window, operand 1, single buffered']
    #allocation5 [shape = 's32[1]{0}', space=sflag, size = 0x4, scoped, tag = 'scoped memory for tpu_custom_call.1']
    %8 = vsyncpa [#allocation3], 0
    %9 = vsyncpa [#allocation5], 0
    // Predicated region
    $region2: #{tpu_custom_call.1} parent=1 // pred_check
      _
    $region3: #{tpu_custom_call.1} parent=1 // pred_check_branch
      %11 = sbr.rel (0) target = $region5
    $region4: #{tpu_custom_call.1} parent=1 // pred_region
      %13 = vsyncadd [#allocation3], 0
      %s15 = sshll.u32 %s0, 4
      %s16 = int_to_ptr.hbm [resolvable:$true] %s15
      %s17 = sshll.u32 [#allocation2], 4
      %s18 = int_to_ptr.vmem [resolvable:$true] %s17
      %20 = dma.hbm_to_vmem [thread:$0]  %s16, 128, %s18, [#allocation3]
    $region5: #{tpu_custom_call.1} parent=1 // pred_fallthru
      _
    // Predicated region
    $region6: #{tpu_custom_call.1} parent=1 // pred_check
      _
    $region7: #{tpu_custom_call.1} parent=1 // pred_check_branch
      %22 = sbr.rel (0) target = $region9
    $region8: #{tpu_custom_call.1} parent=1 // pred_region
      %24 = vsyncadd [#allocation5], 0
      %s26 = sshll.u32 %s1, 4
      %s27 = int_to_ptr.hbm [resolvable:$true] %s26
      %s28 = sshll.u32 [#allocation4], 4
      %s29 = int_to_ptr.vmem [resolvable:$true] %s28
      %31 = dma.hbm_to_vmem [thread:$0]  %s27, 64, %s29, [#allocation5]
    $region9: #{tpu_custom_call.1} parent=1 // pred_fallthru
      _
    // Predicated region
    $region10: #{tpu_custom_call.1} parent=1 // pred_check
      _
    $region11: #{tpu_custom_call.1} parent=1 // pred_check_branch
      %33 = sbr.rel (0) target = $region13
    $region12: #{tpu_custom_call.1} parent=1 // pred_region
      _
    $region13: #{tpu_custom_call.1} parent=1 // pred_fallthru
      _
    // Predicated region
    $region14: #{tpu_custom_call.1} parent=1 // pred_check
      _
    $region15: #{tpu_custom_call.1} parent=1 // pred_check_branch
      %35 = sbr.rel (0) target = $region17
    $region16: #{tpu_custom_call.1} parent=1 // pred_region
      %37 = dma.done [#allocation3], 128
    $region17: #{tpu_custom_call.1} parent=1 // pred_fallthru
      _
    // Predicated region
    $region18: #{tpu_custom_call.1} parent=1 // pred_check
      _
    $region19: #{tpu_custom_call.1} parent=1 // pred_check_branch
      %39 = sbr.rel (0) target = $region21
    $region20: #{tpu_custom_call.1} parent=1 // pred_region
      %41 = dma.done [#allocation5], 64
    $region21: #{tpu_custom_call.1} parent=1 // pred_fallthru
      _
    %v42 = vld [vmem:[#allocation2] sm:$0xff]
    %v43 = vld [vmem:[#allocation4] sm:$0xf]
    %v44 = vld [vmem:[%s2] sm:$0x1]
    %v46 = vperm.slane %v44, 0
    %vm48 = vcmask 130048
    %v50 = vsel %vm48, %v42, 0
    %v53 = vsel %vm48, %v43, 0
    %55 = vmatpush.xpose.msra.mxu0 0.0
    %56 = vmatpush.xpose.msra.mxu0 0.0
    %57 = vmatpush.xpose.msra.mxu0 0.0
    %58 = vmatpush.xpose.msra.mxu0 0.0
    %59 = vmatpush.xpose.msra.mxu0 0.0
    %60 = vmatpush.xpose.msra.mxu0 0.0
    %61 = vmatpush.xpose.msra.mxu0 0.0
    %62 = vmatpush.xpose.msra.mxu0 0.0
    %63 = vmatpush.xpose.msra.mxu0 0.0
    %64 = vmatpush.xpose.msra.mxu0 0.0
    %65 = vmatpush.xpose.msra.mxu0 0.0
    %66 = vmatpush.xpose.msra.mxu0 0.0
    %67 = vmatpush.xpose.msra.mxu0 0.0
    %68 = vmatpush.xpose.msra.mxu0 0.0
    %69 = vmatpush.xpose.msra.mxu0 0.0
    %70 = vmatpush.xpose.msra.mxu0 %v53
    %71 = vmatmul.f32.gmra.mxu0 %v50
    %v72 = vpop.f32.mrf.mxu0
    %v73 = vadd.f32 %v46, %v72
    %74 = vdwg.mxu0
    %v75 = vxor.u32 %v73, 2147483648
    %v76 = vmul.f32 %v75, 1.442695
    %v77 = vpow.pop %v76
    %v78 = vadd.f32 %v77, 1.0
    %v79 = vrcp.pop %v78
    %v80 = vmul.f32 %v78, %v79
    %v81 = vsub.f32 1.0, %v80
    %v82 = vmul.f32 %v79, %v81
    %v83 = vadd.f32 %v79, %v82
    %vm84 = vweird.f32 %v78
    %vm85 = vweird.f32 %v79
    %vm86 = vmor %vm84, %vm85
    %v87 = vsel %vm86, %v79, %v83
    %v88 = vand.u32 2147483647, %v78
    %vm89 = vcmp.eq.f32.partialorder %v88, 8.507059e+37
    %v90 = vand.u32 %v78, 2147483648
    %v91 = vor.u32 1.1754944e-38, %v90
    %v92 = vsel %vm89, %v91, %v87
    %v93 = vmul.f32 1.0, %v92
    %vm94 = vcmask 31744
    %95 = vst.msk [vmem:[%s3] sm:$0xff] %vm94, %v93
    // Predicated region
    $region22: #{tpu_custom_call.1} parent=1 // pred_check
      _
    $region23: #{tpu_custom_call.1} parent=1 // pred_check_branch
      %97 = sbr.rel (0) target = $region25
    $region24: #{tpu_custom_call.1} parent=1 // pred_region
      _
    $region25: #{tpu_custom_call.1} parent=1 // pred_fallthru
      _
    // Predicated region
    $region26: #{tpu_custom_call.1} parent=1 // pred_check
      _
    $region27: #{tpu_custom_call.1} parent=1 // pred_check_branch
      %99 = sbr.rel (0) target = $region29
    $region28: #{tpu_custom_call.1} parent=1 // pred_region
      _
    $region29: #{tpu_custom_call.1} parent=1 // pred_fallthru
      _
    %100 = vsyncpa [#allocation3], 1
    %101 = vsyncpa [#allocation5], 1

</llo_original>
